<compile_context>
chip_gen: v6e
topology: v6e:2x2x1
jax: 0.10.0
libtpu: 0.0.40
codegen_flags: <defaults>
</compile_context>

<pallas_src>
import jax
import jax.numpy as jnp
from jax.experimental import pallas as pl
from jax.experimental.pallas import tpu as pltpu


def identity(x: jax.Array) -> jax.Array:
    """Optimal Identity forward: no kernel, no copy, no HBM traffic."""
    return x


# ----------------------------------------------------------------------------
# Primary path: aliased no-op. Output buffer == input buffer, so any data
# movement would be redundant. The body only does a harmless scalar SMEM write
# so the lowered program is non-empty; has_side_effects=True keeps the call
# from being dead-code-eliminated.
# ----------------------------------------------------------------------------
def _alias_noop_kernel(x_hbm, o_hbm, flag_smem):
    del x_hbm, o_hbm                  # output aliases input; nothing to move
    flag_smem[0] = jnp.int32(1)       # harmless scalar write; keeps body non-empty


def identity_pallas(x: jax.Array) -> jax.Array:
    """Identity via pallas_call: aliased output, zero in-kernel data movement.

    For zero HBM traffic end-to-end, call under jit with the input donated,
    e.g. ``jax.jit(identity_pallas, donate_argnums=0)(x)``. Without donation,
    XLA materializes one defensive copy of ``x`` before the aliased call.
    """
    return pl.pallas_call(
        _alias_noop_kernel,
        out_shape=jax.ShapeDtypeStruct(x.shape, x.dtype),
        in_specs=[pl.BlockSpec(memory_space=pl.ANY)],   # raw HBM ref, no auto-DMA
        out_specs=pl.BlockSpec(memory_space=pl.ANY),    # raw HBM ref, no auto-DMA
        scratch_shapes=[pltpu.SMEM((1,), jnp.int32)],
        input_output_aliases={0: 0},
        compiler_params=pltpu.CompilerParams(has_side_effects=True),
    )(x)


# ----------------------------------------------------------------------------
# Fallback path: a real copy into a fresh buffer, done as one HBM->HBM DMA.
# ----------------------------------------------------------------------------
def _hbm_copy_kernel(x_hbm, o_hbm, sem):
    cp = pltpu.make_async_copy(x_hbm, o_hbm, sem)
    cp.start()
    cp.wait()
    # TODO(synk): on v7x, split into >=2 chunks over a 2-TC core_map so both
    # TensorCores' DMA-issue capacity is used; a single DMA already saturates
    # HBM bandwidth on v5e/v6e.


def identity_pallas_copy(x: jax.Array) -> jax.Array:
    """Identity that returns a fresh buffer: single whole-array HBM->HBM DMA."""
    return pl.pallas_call(
        _hbm_copy_kernel,
        out_shape=jax.ShapeDtypeStruct(x.shape, x.dtype),
        in_specs=[pl.BlockSpec(memory_space=pl.ANY)],
        out_specs=pl.BlockSpec(memory_space=pl.ANY),
        scratch_shapes=[pltpu.SemaphoreType.DMA(())],
        compiler_params=pltpu.CompilerParams(has_side_effects=True),
    )(x)


if __name__ == "__main__":
    key = jax.random.PRNGKey(0)
    # Small NCHW input consistent with a conv-net feature map.
    x = jax.random.normal(key, (2, 4, 16, 16), dtype=jnp.float32)

    # Primary (aliased no-op) path.
    y = identity_pallas(x)
    jax.block_until_ready(y)
    assert y.shape == x.shape and y.dtype == x.dtype
    assert bool(jnp.all(y == x))

    # Fallback (fresh-buffer HBM->HBM DMA copy) path.
    y2 = identity_pallas_copy(x)
    jax.block_until_ready(y2)
    assert y2.shape == x.shape and y2.dtype == x.dtype
    assert bool(jnp.all(y2 == x))

    # Kernel-free optimal path is a pure passthrough.
    assert identity(x) is x

    print("KERNEL_OK")
</pallas_src>

<mosaic_0001>
module attributes {stable_mosaic.version = 11 : i64} {
  func.func @_alias_noop_kernel(%arg0: memref<2x4x16x16xf32, #tpu.memory_space<any>>, %arg1: memref<2x4x16x16xf32, #tpu.memory_space<any>>, %arg2: memref<1xi32, #tpu.memory_space<smem>>) attributes {dimension_semantics = [], scalar_prefetch = 0 : i64, scratch_operands = 1 : i64, tpu.core_type = #tpu.core_type<tc>} {
    %c1_i32 = arith.constant 1 : i32
    %c0 = arith.constant 0 : index
    %0 = memref.load %arg2[%c0] : memref<1xi32, #tpu.memory_space<smem>>
    memref.store %c1_i32, %arg2[%c0] : memref<1xi32, #tpu.memory_space<smem>>
    return
  }
}

</mosaic_0001>

<llo_original>
// kernel: tpu_custom_call.1
$region0: #{tpu_custom_call.1}
  #allocation0 [shape = 'u32[]', space=smem, size = 0x4, offset = 0x4, fixed_abs, tag = 'smem constant byte address 0x4 - core index']
  #allocation1 [shape = 'u32[144,128]{1,0:T(1,128)}', space=vmem, size = 0x12000, scoped, tag = 'internal scratch']
  #allocation2 [shape = 's32[1]{0:T(128)}', space=smem, size = 0x200, scoped, tag = 'scratch operand']
  %s0 = inlined_call_operand.hbm [shape: f32[2,4,16,16], index: 0, kind: input, shape index: {}, may-alias: {0,1}]
  %s1 = inlined_call_operand.hbm [shape: f32[2,4,16,16], index: 1, kind: output, shape index: {}, may-alias: {0,1}]
  %s2 = sld [smem:[#allocation0]]
  $region2: #{tpu_custom_call.1} parent=0
    _
  %s4 = ssub.s32 1, %s2
  %s5 = scalar_select 0, %s4, %s2
  %s6 = scalar_lea.smem [#allocation2], 0
  %7 = sst [smem:[%s6]] 1

</llo_original>
